<compile_context>
chip_gen: v5e
topology: v5e:2x2
jax: 0.10.0
libtpu: 0.0.40
codegen_flags: <defaults>
</compile_context>

<pallas_src>
import functools
import math

import jax
import jax.numpy as jnp
from jax.experimental import pallas as pl
from jax.experimental.pallas import tpu as pltpu

_LANE = 128      # vreg lane width
_SUBLANE = 8     # f32 vreg sublane count


def _round_up(n, m):
    return ((n + m - 1) // m) * m


# --------------------------------------------------------------------------
# Kernel
# --------------------------------------------------------------------------
def _critic_kernel(num_hidden, *refs):
    """refs = (x, w0, b0, ..., w_{L-1}, b_{L-1}, w3t, b3, v_out).

    x, w*        : bf16 (streamed)
    b*, b3, v    : f32
    Hidden layers are statically unrolled; all dots accumulate in f32 on the
    MXU, bias-add + tanh run in f32 on the VPU/EUP.
    """
    h = refs[0][...]                                   # bf16 (tb, in_p)
    idx = 1
    for _ in range(num_hidden):
        w = refs[idx][...]                             # bf16 (fan, hid_p)
        b = refs[idx + 1][...]                         # f32  (1, hid_p)
        idx += 2
        acc = jnp.dot(h, w, preferred_element_type=jnp.float32)
        h = jnp.tanh(acc + b).astype(jnp.bfloat16)     # f32 math, bf16 stream

    w3t = refs[idx][...]                               # bf16 (8, hid_p) (row 0 = W3^T)
    b3 = refs[idx + 1][...]                            # f32  (8, 1)
    v_ref = refs[idx + 2]                              # f32  (8, tb)

    # Transposed value head: [8, tb] = w3t @ h^T  -> lane-dense output block.
    v = jax.lax.dot_general(
        w3t, h, (((1,), (1,)), ((), ())),
        preferred_element_type=jnp.float32)
    v_ref[...] = (v + b3).astype(v_ref.dtype)


# --------------------------------------------------------------------------
# Parameter packing (runs once, off the hot path)
# --------------------------------------------------------------------------
def pack_critic_params(hidden_params, fc3_params, num_inputs):
    """Pads / transposes / casts parameters for the kernel.

    hidden_params: list of (W[in, hidden], b[1, hidden])  (already [in, out]).
    fc3_params:    (W3[hidden, 1], b3[1, 1]).
    Returns a flat tuple (w0, b0, ..., w3t, b3p) of device arrays.
    """
    in_p = _round_up(num_inputs, 16)       # bf16 sublane tile; tiny pad only
    packed = []
    fan = in_p
    for w, b in hidden_params:
        hid = w.shape[1]
        hid_p = _round_up(hid, _LANE)
        w_p = (jnp.zeros((fan, hid_p), jnp.bfloat16)
               .at[: w.shape[0], :hid].set(w.astype(jnp.bfloat16)))
        b_p = jnp.zeros((1, hid_p), jnp.float32).at[:, :hid].set(b)
        packed += [w_p, b_p]
        fan = hid_p

    w3, b3 = fc3_params
    hid_p = fan
    # Transposed value head, padded to 8 sublanes; only row 0 is meaningful.
    w3t = (jnp.zeros((_SUBLANE, hid_p), jnp.bfloat16)
           .at[0, : w3.shape[0]].set(w3[:, 0].astype(jnp.bfloat16)))
    b3_p = jnp.zeros((_SUBLANE, 1), jnp.float32) + b3.astype(jnp.float32)
    packed += [w3t, b3_p]
    return tuple(packed)


# --------------------------------------------------------------------------
# Forward wrapper
# --------------------------------------------------------------------------
def _choose_batch_tile(B, batch_tile):
    """Returns (tb, B_p): per-step batch tile and padded batch."""
    B8 = _round_up(B, _SUBLANE)
    if B8 <= _LANE:
        return B8, B8                      # single step; block == full array
    # When tiling, the [8, tb] output block needs tb % 128 == 0 (lane-dense).
    tb = _round_up(min(batch_tile, B8), _LANE)
    # Guarantee >= 2 grid steps so both v7x TensorCores get work.
    tb = min(tb, _round_up((B8 + 1) // 2, _LANE))
    return tb, _round_up(B8, tb)


def critic_forward(x, packed_params, *, batch_tile=1024):
    """x: [B, num_inputs] f32.  packed_params: output of pack_critic_params.
    Returns v: [B, 1] f32."""
    B, num_inputs = x.shape
    num_hidden = (len(packed_params) - 2) // 2
    in_p = packed_params[0].shape[0]

    tb, B_p = _choose_batch_tile(B, batch_tile)

    # bf16 stream; pad only to (B_p, in_p) — a few rows / <=15 cols, fused by XLA.
    x_bf = x.astype(jnp.bfloat16)
    if (B_p, in_p) != (B, num_inputs):
        x_bf = jnp.pad(x_bf, ((0, B_p - B), (0, in_p - num_inputs)))

    in_specs = [pl.BlockSpec((tb, in_p), lambda i: (i, 0))]
    for p in packed_params:
        # Constant index_map -> weights/biases stay VMEM-resident across steps.
        in_specs.append(pl.BlockSpec(p.shape, lambda i: (0, 0)))

    out_specs = pl.BlockSpec((_SUBLANE, tb), lambda i: (0, i))
    out_shape = jax.ShapeDtypeStruct((_SUBLANE, B_p), jnp.float32)

    kernel = functools.partial(_critic_kernel, num_hidden)
    vt = pl.pallas_call(
        kernel,
        grid=(B_p // tb,),
        in_specs=in_specs,
        out_specs=out_specs,
        out_shape=out_shape,
        compiler_params=pltpu.CompilerParams(
            dimension_semantics=("parallel",),
        ),
    )(x_bf, *packed_params)

    # Row 0 of the transposed output is the value head.
    return vt[0, :B].reshape(B, 1)


# --------------------------------------------------------------------------
# Init + reference
# --------------------------------------------------------------------------
def init_critic_params(key, num_inputs, hidden_size, num_layers):
    """PyTorch nn.Linear-style init: U(-1/sqrt(fan_in), 1/sqrt(fan_in));
    fc3 weight *= 0.1, bias = 0.  Weights stored as [in, out]."""
    hidden_params = []
    for i in range(num_layers):
        fan_in = num_inputs if i == 0 else hidden_size
        bound = 1.0 / math.sqrt(fan_in)
        key, kw, kb = jax.random.split(key, 3)
        w = jax.random.uniform(kw, (fan_in, hidden_size), jnp.float32, -bound, bound)
        b = jax.random.uniform(kb, (1, hidden_size), jnp.float32, -bound, bound)
        hidden_params.append((w, b))
    bound = 1.0 / math.sqrt(hidden_size)
    key, kw = jax.random.split(key)
    w3 = jax.random.uniform(kw, (hidden_size, 1), jnp.float32, -bound, bound) * 0.1
    b3 = jnp.zeros((1, 1), jnp.float32)
    return hidden_params, (w3, b3)


def critic_forward_ref(x, hidden_params, fc3_params):
    h = x
    for w, b in hidden_params:
        h = jnp.tanh(h @ w + b)
    return h @ fc3_params[0] + fc3_params[1]


# --------------------------------------------------------------------------
if __name__ == "__main__":
    # Small shapes consistent with the module: args.num_layers=2, hidden_size=32.
    batch, num_inputs = 4, 16
    hidden_size, num_layers = 32, 2

    key = jax.random.PRNGKey(0)
    key, kx = jax.random.split(key)
    x = jax.random.normal(kx, (batch, num_inputs), jnp.float32)

    hidden_params, fc3_params = init_critic_params(
        key, num_inputs, hidden_size, num_layers
    )
    packed = pack_critic_params(hidden_params, fc3_params, num_inputs)

    fwd = jax.jit(functools.partial(critic_forward, batch_tile=1024))
    v = fwd(x, packed)
    jax.block_until_ready(v)

    v_ref = critic_forward_ref(x, hidden_params, fc3_params)
    assert v.shape == (batch, 1), v.shape
    # bf16-streamed MXU path vs f32 (DEFAULT-precision) reference.
    assert jnp.allclose(v, v_ref, atol=5e-3, rtol=1e-2), (v, v_ref)

    print("KERNEL_OK")
</pallas_src>

<mosaic_0001>
module attributes {stable_mosaic.version = 11 : i64} {
  func.func @_critic_kernel(%arg0: i32, %arg1: memref<8x16xbf16, #tpu.memory_space<vmem>>, %arg2: memref<16x128xbf16, #tpu.memory_space<vmem>>, %arg3: memref<1x128xf32, #tpu.memory_space<vmem>>, %arg4: memref<128x128xbf16, #tpu.memory_space<vmem>>, %arg5: memref<1x128xf32, #tpu.memory_space<vmem>>, %arg6: memref<8x128xbf16, #tpu.memory_space<vmem>>, %arg7: memref<8x1xf32, #tpu.memory_space<vmem>>, %arg8: memref<8x8xf32, #tpu.memory_space<vmem>>) attributes {dimension_semantics = [#tpu.dimension_semantics<parallel>], iteration_bounds = array<i64: 1>, scalar_prefetch = 0 : i64, scratch_operands = 0 : i64, tpu.core_type = #tpu.core_type<tc>, window_params = [{transform_indices = @transform_0, window_bounds = array<i64: 8, 16>}, {pipeline_mode = #tpu.pipeline_mode<synchronous>, transform_indices = @transform_1, window_bounds = array<i64: 16, 128>}, {pipeline_mode = #tpu.pipeline_mode<synchronous>, transform_indices = @transform_2, window_bounds = array<i64: 1, 128>}, {pipeline_mode = #tpu.pipeline_mode<synchronous>, transform_indices = @transform_3, window_bounds = array<i64: 128, 128>}, {pipeline_mode = #tpu.pipeline_mode<synchronous>, transform_indices = @transform_4, window_bounds = array<i64: 1, 128>}, {pipeline_mode = #tpu.pipeline_mode<synchronous>, transform_indices = @transform_5, window_bounds = array<i64: 8, 128>}, {pipeline_mode = #tpu.pipeline_mode<synchronous>, transform_indices = @transform_6, window_bounds = array<i64: 8, 1>}, {transform_indices = @transform_7, window_bounds = array<i64: 8, 8>}]} {
    %c0 = arith.constant 0 : index
    %c0_0 = arith.constant 0 : index
    %0 = vector.load %arg1[%c0, %c0_0] : memref<8x16xbf16, #tpu.memory_space<vmem>>, vector<8x16xbf16>
    %c0_1 = arith.constant 0 : index
    %c0_2 = arith.constant 0 : index
    %1 = vector.load %arg2[%c0_1, %c0_2] : memref<16x128xbf16, #tpu.memory_space<vmem>>, vector<16x128xbf16>
    %c0_3 = arith.constant 0 : index
    %c0_4 = arith.constant 0 : index
    %2 = vector.load %arg3[%c0_3, %c0_4] : memref<1x128xf32, #tpu.memory_space<vmem>>, vector<1x128xf32>
    %cst = arith.constant dense<0.000000e+00> : vector<8x128xf32>
    %3 = tpu.matmul %0, %1, %cst {dimension_numbers = #tpu.dot_dimension_numbers<[1], [0], [0], [1], [0, 0, 1, 1], [], []>} : vector<8x16xbf16>, vector<16x128xbf16>, vector<8x128xf32> -> vector<8x128xf32>
    %4 = vector.broadcast %2 : vector<1x128xf32> to vector<8x128xf32>
    %5 = arith.addf %3, %4 : vector<8x128xf32>
    %6 = math.tanh %5 : vector<8x128xf32>
    %7 = arith.truncf %6 : vector<8x128xf32> to vector<8x128xbf16>
    %c0_5 = arith.constant 0 : index
    %c0_6 = arith.constant 0 : index
    %8 = vector.load %arg4[%c0_5, %c0_6] : memref<128x128xbf16, #tpu.memory_space<vmem>>, vector<128x128xbf16>
    %c0_7 = arith.constant 0 : index
    %c0_8 = arith.constant 0 : index
    %9 = vector.load %arg5[%c0_7, %c0_8] : memref<1x128xf32, #tpu.memory_space<vmem>>, vector<1x128xf32>
    %cst_9 = arith.constant dense<0.000000e+00> : vector<8x128xf32>
    %10 = tpu.matmul %7, %8, %cst_9 {dimension_numbers = #tpu.dot_dimension_numbers<[1], [0], [0], [1], [0, 0, 1, 1], [], []>} : vector<8x128xbf16>, vector<128x128xbf16>, vector<8x128xf32> -> vector<8x128xf32>
    %11 = vector.broadcast %9 : vector<1x128xf32> to vector<8x128xf32>
    %12 = arith.addf %10, %11 : vector<8x128xf32>
    %13 = math.tanh %12 : vector<8x128xf32>
    %14 = arith.truncf %13 : vector<8x128xf32> to vector<8x128xbf16>
    %c0_10 = arith.constant 0 : index
    %c0_11 = arith.constant 0 : index
    %15 = vector.load %arg6[%c0_10, %c0_11] : memref<8x128xbf16, #tpu.memory_space<vmem>>, vector<8x128xbf16>
    %c0_12 = arith.constant 0 : index
    %c0_13 = arith.constant 0 : index
    %16 = vector.load %arg7[%c0_12, %c0_13] : memref<8x1xf32, #tpu.memory_space<vmem>>, vector<8x1xf32>
    %cst_14 = arith.constant dense<0.000000e+00> : vector<8x8xf32>
    %17 = tpu.matmul %15, %14, %cst_14 {dimension_numbers = #tpu.dot_dimension_numbers<[1], [1], [0], [0], [0, 0, 1, 0], [], []>} : vector<8x128xbf16>, vector<8x128xbf16>, vector<8x8xf32> -> vector<8x8xf32>
    %18 = vector.broadcast %16 : vector<8x1xf32> to vector<8x8xf32>
    %19 = arith.addf %17, %18 : vector<8x8xf32>
    %c0_15 = arith.constant 0 : index
    %c0_16 = arith.constant 0 : index
    %20 = vector.load %arg8[%c0_15, %c0_16] : memref<8x8xf32, #tpu.memory_space<vmem>>, vector<8x8xf32>
    tpu.vector_store %arg8[%c0_15, %c0_16], %19 {strides = array<i32>} : memref<8x8xf32, #tpu.memory_space<vmem>>, vector<8x8xf32>,
    return
  }
  func.func @transform_0(%arg0: i32) -> (i32, i32) {
    %c0_i32 = arith.constant 0 : i32
    %c0_i32_0 = arith.constant 0 : i32
    return %arg0, %c0_i32 : i32, i32
  }
  func.func @transform_1(%arg0: i32) -> (i32, i32) {
    %c0_i32 = arith.constant 0 : i32
    %c0_i32_0 = arith.constant 0 : i32
    %c0_i32_1 = arith.constant 0 : i32
    return %c0_i32, %c0_i32_0 : i32, i32
  }
  func.func @transform_2(%arg0: i32) -> (i32, i32) {
    %c0_i32 = arith.constant 0 : i32
    %c0_i32_0 = arith.constant 0 : i32
    %c0_i32_1 = arith.constant 0 : i32
    return %c0_i32, %c0_i32_0 : i32, i32
  }
  func.func @transform_3(%arg0: i32) -> (i32, i32) {
    %c0_i32 = arith.constant 0 : i32
    %c0_i32_0 = arith.constant 0 : i32
    %c0_i32_1 = arith.constant 0 : i32
    return %c0_i32, %c0_i32_0 : i32, i32
  }
  func.func @transform_4(%arg0: i32) -> (i32, i32) {
    %c0_i32 = arith.constant 0 : i32
    %c0_i32_0 = arith.constant 0 : i32
    %c0_i32_1 = arith.constant 0 : i32
    return %c0_i32, %c0_i32_0 : i32, i32
  }
  func.func @transform_5(%arg0: i32) -> (i32, i32) {
    %c0_i32 = arith.constant 0 : i32
    %c0_i32_0 = arith.constant 0 : i32
    %c0_i32_1 = arith.constant 0 : i32
    return %c0_i32, %c0_i32_0 : i32, i32
  }
  func.func @transform_6(%arg0: i32) -> (i32, i32) {
    %c0_i32 = arith.constant 0 : i32
    %c0_i32_0 = arith.constant 0 : i32
    %c0_i32_1 = arith.constant 0 : i32
    return %c0_i32, %c0_i32_0 : i32, i32
  }
  func.func @transform_7(%arg0: i32) -> (i32, i32) {
    %c0_i32 = arith.constant 0 : i32
    %c0_i32_0 = arith.constant 0 : i32
    return %c0_i32, %arg0 : i32, i32
  }
}

</mosaic_0001>

<llo_original>
// kernel: critic_forward.1
$region0: #{critic_forward.1}
  #allocation0 [shape = 'u32[]', space=smem, size = 0x4, offset = 0x4, fixed_abs, tag = 'smem constant byte address 0x4 - core index']
  #allocation1 [shape = 'u32[72,128]{1,0:T(1,128)}', space=vmem, size = 0x9000, scoped, tag = 'internal scratch']
  %s0 = inlined_call_operand.vmem [shape: bf16[8,16], index: 0, kind: input, shape index: {}]
  %s1 = inlined_call_operand.vmem [shape: bf16[16,128], index: 1, kind: input, shape index: {}]
  %s2 = inlined_call_operand.vmem [shape: f32[1,128], index: 2, kind: input, shape index: {}]
  %s3 = inlined_call_operand.hbm [shape: bf16[128,128], index: 3, kind: input, shape index: {}]
  %s4 = inlined_call_operand.vmem [shape: f32[1,128], index: 4, kind: input, shape index: {}]
  %s5 = inlined_call_operand.vmem [shape: bf16[8,128], index: 5, kind: input, shape index: {}]
  %s6 = inlined_call_operand.vmem [shape: f32[8,1], index: 6, kind: input, shape index: {}]
  %s7 = inlined_call_operand.vmem [shape: f32[8,8], index: 7, kind: output, shape index: {}]
  %s8 = sld [smem:[#allocation0]]
  $region42: #{critic_forward.1} parent=0
    _
  %s10 = ssub.s32 1, %s8
  %s11 = scalar_select 0, %s10, %s8
  $region1: #{critic_forward.1} parent=0
    #allocation2 [shape = 'u8[32768]{0}', space=vmem, size = 0x8000, scoped, tag = 'input window, operand 3, single buffered']
    #allocation3 [shape = 's32[1]{0}', space=sflag, size = 0x4, scoped, tag = 'scoped memory for critic_forward.1']
    %12 = vsyncpa [#allocation3], 0
    // Predicated region
    $region2: #{critic_forward.1} parent=1 // pred_check
      _
    $region3: #{critic_forward.1} parent=1 // pred_check_branch
      %14 = sbr.rel (0) target = $region5
    $region4: #{critic_forward.1} parent=1 // pred_region
      _
    $region5: #{critic_forward.1} parent=1 // pred_fallthru
      _
    // Predicated region
    $region6: #{critic_forward.1} parent=1 // pred_check
      _
    $region7: #{critic_forward.1} parent=1 // pred_check_branch
      %16 = sbr.rel (0) target = $region9
    $region8: #{critic_forward.1} parent=1 // pred_region
      _
    $region9: #{critic_forward.1} parent=1 // pred_fallthru
      _
    // Predicated region
    $region10: #{critic_forward.1} parent=1 // pred_check
      _
    $region11: #{critic_forward.1} parent=1 // pred_check_branch
      %18 = sbr.rel (0) target = $region13
    $region12: #{critic_forward.1} parent=1 // pred_region
      _
    $region13: #{critic_forward.1} parent=1 // pred_fallthru
      _
    // Predicated region
    $region14: #{critic_forward.1} parent=1 // pred_check
      _
    $region15: #{critic_forward.1} parent=1 // pred_check_branch
      %20 = sbr.rel (0) target = $region17
    $region16: #{critic_forward.1} parent=1 // pred_region
      %22 = vsyncadd [#allocation3], 0
      %s23 = sshll.u32 %s3, 4
      %s24 = int_to_ptr.hbm [resolvable:$true] %s23
      %s25 = sshll.u32 [#allocation2], 4
      %s26 = int_to_ptr.vmem [resolvable:$true] %s25
      %31 = dma.hbm_to_vmem [thread:$0]  %s24, 1024, %s26, [#allocation3], 64, 64, 4
    $region17: #{critic_forward.1} parent=1 // pred_fallthru
      _
    // Predicated region
    $region18: #{critic_forward.1} parent=1 // pred_check
      _
    $region19: #{critic_forward.1} parent=1 // pred_check_branch
      %33 = sbr.rel (0) target = $region21
    $region20: #{critic_forward.1} parent=1 // pred_region
      _
    $region21: #{critic_forward.1} parent=1 // pred_fallthru
      _
    // Predicated region
    $region22: #{critic_forward.1} parent=1 // pred_check
      _
    $region23: #{critic_forward.1} parent=1 // pred_check_branch
      %35 = sbr.rel (0) target = $region25
    $region24: #{critic_forward.1} parent=1 // pred_region
      _
    $region25: #{critic_forward.1} parent=1 // pred_fallthru
      _
    // Predicated region
    $region26: #{critic_forward.1} parent=1 // pred_check
      _
    $region27: #{critic_forward.1} parent=1 // pred_check_branch
      %37 = sbr.rel (0) target = $region29
    $region28: #{critic_forward.1} parent=1 // pred_region
      _
    $region29: #{critic_forward.1} parent=1 // pred_fallthru
      _
    // Predicated region
    $region30: #{critic_forward.1} parent=1 // pred_check
      _
    $region31: #{critic_forward.1} parent=1 // pred_check_branch
      %39 = sbr.rel (0) target = $region33
    $region32: #{critic_forward.1} parent=1 // pred_region
      %41 = dma.done [#allocation3], 1024
    $region33: #{critic_forward.1} parent=1 // pred_fallthru
      _
    %v43 = vld [vmem:[%s0] sm:$0xf]
    %v44 = vld [vmem:[%s1] sm:$0xf]
    %v45 = vld [vmem:[%s1 + $0x4] sm:$0xf]
    %v46 = vld [vmem:[%s2] sm:$0x1]
    %v48 = vperm.slane %v46, 0
    %v52 = vunpack.c.l.b16 %v44
    %v53 = vunpack.c.l.b16 %v45
    %v54 = vpack.c.b16 %v53, %v52
    %vm56 = vcmask 130048
    %v58 = vsel %vm56, %v43, 0
    %60 = vmatpush.bf16.msra.mxu0 0
    %61 = vmatpush.bf16.msra.mxu0 0
    %62 = vmatpush.bf16.msra.mxu0 0
    %63 = vmatpush.bf16.msra.mxu0 0
    %64 = vmatpush.bf16.msra.mxu0 0
    %65 = vmatpush.bf16.msra.mxu0 0
    %66 = vmatpush.bf16.msra.mxu0 0
    %67 = vmatpush.bf16.msra.mxu0 %v54
    %68 = vmatmul.bf16.gmra.mxu0 %v58
    %v69 = vpop.f32.mrf.mxu0
    %v70 = vadd.f32 %v48, %v69
    %v71 = vpop.f32.mrf.mxu0
    %72 = vdwg.mxu0
    %v73 = vtanh.pop %v70
    %v74 = vpack.c.bf16 %v73, %v73
    %v75 = vld [vmem:[#allocation2] sm:$0xf]
    %v76 = vld [vmem:[#allocation2 + $0x4] sm:$0xf]
    %v77 = vld [vmem:[#allocation2 + $0x8] sm:$0xf]
    %v78 = vld [vmem:[#allocation2 + $0xc] sm:$0xf]
    %v79 = vld [vmem:[#allocation2 + $0x10] sm:$0xf]
    %v80 = vld [vmem:[#allocation2 + $0x14] sm:$0xf]
    %v81 = vld [vmem:[#allocation2 + $0x18] sm:$0xf]
    %v82 = vld [vmem:[#allocation2 + $0x1c] sm:$0xf]
    %v83 = vld [vmem:[#allocation2 + $0x20] sm:$0xf]
    %v84 = vld [vmem:[#allocation2 + $0x24] sm:$0xf]
    %v85 = vld [vmem:[#allocation2 + $0x28] sm:$0xf]
    %v86 = vld [vmem:[#allocation2 + $0x2c] sm:$0xf]
    %v87 = vld [vmem:[#allocation2 + $0x30] sm:$0xf]
    %v88 = vld [vmem:[#allocation2 + $0x34] sm:$0xf]
    %v89 = vld [vmem:[#allocation2 + $0x38] sm:$0xf]
    %v90 = vld [vmem:[#allocation2 + $0x3c] sm:$0xf]
    %v91 = vld [vmem:[%s4] sm:$0x1]
    %v93 = vperm.slane %v91, 0
    %v111 = vunpack.c.l.b16 %v75
    %v112 = vunpack.c.l.b16 %v76
    %v113 = vunpack.c.l.b16 %v77
    %v114 = vunpack.c.l.b16 %v78
    %v115 = vunpack.c.l.b16 %v79
    %v116 = vunpack.c.l.b16 %v80
    %v117 = vunpack.c.l.b16 %v81
    %v118 = vunpack.c.l.b16 %v82
    %v119 = vunpack.c.l.b16 %v83
    %v120 = vunpack.c.l.b16 %v84
    %v121 = vunpack.c.l.b16 %v85
    %v122 = vunpack.c.l.b16 %v86
    %v123 = vunpack.c.l.b16 %v87
    %v124 = vunpack.c.l.b16 %v88
    %v125 = vunpack.c.l.b16 %v89
    %v126 = vunpack.c.l.b16 %v90
    %v127 = vpack.c.b16 %v112, %v111
    %v128 = vpack.c.b16 %v114, %v113
    %v129 = vpack.c.b16 %v116, %v115
    %v130 = vpack.c.b16 %v118, %v117
    %v131 = vpack.c.b16 %v120, %v119
    %v132 = vpack.c.b16 %v122, %v121
    %v133 = vpack.c.b16 %v124, %v123
    %v134 = vpack.c.b16 %v126, %v125
    %143 = vmatpush.bf16.msra.mxu0 %v134
    %144 = vmatpush.bf16.msra.mxu0 %v133
    %145 = vmatpush.bf16.msra.mxu0 %v132
    %146 = vmatpush.bf16.msra.mxu0 %v131
    %147 = vmatpush.bf16.msra.mxu0 %v130
    %148 = vmatpush.bf16.msra.mxu0 %v129
    %149 = vmatpush.bf16.msra.mxu0 %v128
    %150 = vmatpush.bf16.msra.mxu0 %v127
    %151 = vmatmul.bf16.gmra.mxu0 %v74
    %v152 = vpop.f32.mrf.mxu0
    %v153 = vadd.f32 %v93, %v152
    %v154 = vpop.f32.mrf.mxu0
    %155 = vdwg.mxu0
    %v156 = vtanh.pop %v153
    %v157 = vpack.c.bf16 %v156, %v156
    %v158 = vld [vmem:[%s5] sm:$0xf]
    %v159 = vld [vmem:[%s6] sm:$0xff]
    %161 = vset.pattern.permute.xlu0 0
    %162 = vperm.xlu0 %161, %v159
    %v163 = vpop.permute.xlu0 %162
    %165 = vmatpush.bf16.xpose.msra.mxu0 0
    %166 = vmatpush.bf16.xpose.msra.mxu0 0
    %167 = vmatpush.bf16.xpose.msra.mxu0 0
    %168 = vmatpush.bf16.xpose.msra.mxu0 0
    %169 = vmatpush.bf16.xpose.msra.mxu0 0
    %170 = vmatpush.bf16.xpose.msra.mxu0 0
    %171 = vmatpush.bf16.xpose.msra.mxu0 0
    %172 = vmatpush.bf16.xpose.msra.mxu0 %v157
    %173 = vmatmul.bf16.gmra.mxu0 %v158
    %v174 = vpop.f32.mrf.mxu0
    %v175 = vadd.f32 %v163, %v174
    %v176 = vpop.f32.mrf.mxu0
    %177 = vdwg.mxu0
    %vm178 = vcmask 64512
    %179 = vst.msk [vmem:[%s7] sm:$0xff] %vm178, %v175
    // Predicated region
    $region34: #{critic_forward.1} parent=1 // pred_check
      _
    $region35: #{critic_forward.1} parent=1 // pred_check_branch
      %181 = sbr.rel (0) target = $region37
    $region36: #{critic_forward.1} parent=1 // pred_region
      _
    $region37: #{critic_forward.1} parent=1 // pred_fallthru
      _
    // Predicated region
    $region38: #{critic_forward.1} parent=1 // pred_check
      _
    $region39: #{critic_forward.1} parent=1 // pred_check_branch
      %183 = sbr.rel (0) target = $region41
    $region40: #{critic_forward.1} parent=1 // pred_region
      _
    $region41: #{critic_forward.1} parent=1 // pred_fallthru
      _
    %184 = vsyncpa [#allocation3], 1

</llo_original>
